<compile_context>
chip_gen: v6e
topology: v6e:2x2x1
jax: 0.10.0
libtpu: 0.0.40
codegen_flags: <defaults>
</compile_context>

<pallas_src>
import functools

import jax
import jax.numpy as jnp
import numpy as np
from jax.experimental import pallas as pl
from jax.experimental.pallas import tpu as pltpu

_EPS = 1e-12

# VMEM budget for the two double-buffered descriptor tiles.  Kept well below the 48 MiB
# scoped limit we request, which itself leaves headroom on v7x's 64 MiB physical VMEM
# (v5e/v6e have 128 MiB, so this is safe everywhere).
_DESC_TILE_BUDGET = 24 * 1024 * 1024
_VMEM_LIMIT = 48 * 1024 * 1024
_MAX_TILE_N = 4096


def _d2w_kernel(q_ref, descs_ref, w_ref, *, m):
    """One tile: (TN, D) descriptors vs the (1, D) query -> (1, TN) lane-dense weights."""
    q = q_ref[...].astype(jnp.float32)        # (1, D) — resident block (constant index_map)
    x = descs_ref[...].astype(jnp.float32)    # (TN, D); bf16 inputs upcast here (free-ish)

    # distance_from_query (L2): reduce over the descriptor dim (lanes).
    diff = x - q                              # query broadcast over sublanes
    d2 = jnp.sum(diff * diff, axis=-1, keepdims=True)   # (TN, 1)
    d = jnp.sqrt(d2)

    # dist2weights (L2): inverse-distance weighting with static integer exponent m.
    # m is a Python int -> the power unrolls to plain multiplies; sqrt/divide use the EUP.
    inv = 1.0 / (d + _EPS)
    if m <= 0:
        w = jnp.ones_like(inv)
    else:
        w = inv
        for _ in range(int(m) - 1):
            w = w * inv

    # Lane-dense store: move the (TN, 1) column of per-row weights onto lanes (small XLU
    # transpose) so the output block is written with full 128-lane stores, not vst.msk.
    w_ref[...] = jnp.transpose(w).astype(w_ref.dtype)


def _choose_tile_n(n, d, itemsize):
    """Largest row tile whose double-buffered (tile_n, D) blocks fit the VMEM budget."""
    # VMEM pads the lane (last) dim to a multiple of 128, so budget with the padded width.
    lane_padded_row = ((d + 127) // 128) * 128 * itemsize
    rows = _DESC_TILE_BUDGET // (2 * lane_padded_row)
    rows = int(min(rows, _MAX_TILE_N, n))
    if rows >= n:
        return n                       # single full-array block (block == full dims)
    rows = (rows // 128) * 128         # multi-tile path: keep 128-multiples (lane-dense out)
    if rows < 128:
        # TODO(synk): extremely wide descriptors (>~3 MiB per 128-row tile) would need a
        #             D-split inner pipeline; fall back to a single 128-row tile.
        rows = 128
    return rows


def descriptors2weights(q, descs, m, *, dist_type="L2_DIST", tile_n=None):
    """Pallas implementation of Descriptors2Weights.forward(q, descs).

    q:     (D,)   query descriptor
    descs: (N, D) database descriptors (float32 or bfloat16; kept in HBM dtype)
    returns weights of shape (N,), float32
    """
    if dist_type != "L2_DIST":
        raise NotImplementedError("Only the L2_DIST path is implemented.")
    # TODO(synk): COS_DIST branch (NNEnum.COS_DIST) not implemented — formula unavailable.

    n, d = descs.shape
    q2d = q.reshape(1, d)

    if tile_n is None:
        tile_n = _choose_tile_n(n, d, descs.dtype.itemsize)
    tile_n = int(min(tile_n, n))
    if tile_n < n:
        tile_n = max(128, (tile_n // 128) * 128)   # multi-tile path requires 128-multiples

    n_pad = ((n + tile_n - 1) // tile_n) * tile_n
    if n_pad != n:
        descs = jnp.pad(descs, ((0, n_pad - n), (0, 0)))

    kernel = functools.partial(_d2w_kernel, m=int(m))

    out = pl.pallas_call(
        kernel,
        out_shape=jax.ShapeDtypeStruct((1, n_pad), jnp.float32),
        grid=(n_pad // tile_n,),
        in_specs=[
            # Query: same block every step -> stays resident in VMEM across the grid.
            pl.BlockSpec((1, d), lambda i: (0, 0)),
            # Descriptor tile: the HBM-bandwidth-bound stream (big tiles, double-buffered).
            pl.BlockSpec((tile_n, d), lambda i: (i, 0)),
        ],
        # Lane-dense output: one (1, tile_n) row block per grid step.
        out_specs=pl.BlockSpec((1, tile_n), lambda i: (0, i)),
        compiler_params=pltpu.CompilerParams(
            dimension_semantics=("parallel",),
            vmem_limit_bytes=_VMEM_LIMIT,
        ),
    )(q2d, descs)

    return out.reshape(n_pad)[:n]


def _reference(q, descs, m):
    q32 = q.astype(jnp.float32)
    x32 = descs.astype(jnp.float32)
    dists = jnp.sqrt(jnp.sum((x32 - q32[None, :]) ** 2, axis=-1))
    return 1.0 / ((dists + _EPS) ** m)


if __name__ == "__main__":
    key = jax.random.PRNGKey(0)
    k_q, k_d, k_q2, k_d2 = jax.random.split(key, 4)

    # Case 1: small shapes matching the module (single full-array tile, auto tiling).
    D, N, M = 32, 64, 2
    q = jax.random.normal(k_q, (D,), dtype=jnp.float32)
    descs = jax.random.normal(k_d, (N, D), dtype=jnp.float32)
    w = jax.block_until_ready(descriptors2weights(q, descs, M))
    np.testing.assert_allclose(
        np.asarray(w), np.asarray(_reference(q, descs, M)), rtol=1e-5, atol=1e-6)

    # Case 2: multi-tile grid + ragged-N padding path with bf16 descriptors kept in HBM.
    D2, N2, M2 = 48, 300, 3
    q2 = jax.random.normal(k_q2, (D2,), dtype=jnp.float32)
    descs2 = jax.random.normal(k_d2, (N2, D2), dtype=jnp.float32).astype(jnp.bfloat16)
    w2 = jax.block_until_ready(descriptors2weights(q2, descs2, M2, tile_n=128))
    np.testing.assert_allclose(
        np.asarray(w2), np.asarray(_reference(q2, descs2, M2)), rtol=1e-4, atol=1e-6)

    print("KERNEL_OK")
</pallas_src>

<mosaic_0001>
module attributes {stable_mosaic.version = 11 : i64} {
  func.func @_d2w_kernel(%arg0: i32, %arg1: memref<1x32xf32, #tpu.memory_space<vmem>>, %arg2: memref<64x32xf32, #tpu.memory_space<vmem>>, %arg3: memref<1x64xf32, #tpu.memory_space<vmem>>) attributes {dimension_semantics = [#tpu.dimension_semantics<parallel>], iteration_bounds = array<i64: 1>, scalar_prefetch = 0 : i64, scratch_operands = 0 : i64, tpu.core_type = #tpu.core_type<tc>, window_params = [{pipeline_mode = #tpu.pipeline_mode<synchronous>, transform_indices = @transform_0, window_bounds = array<i64: 1, 32>}, {transform_indices = @transform_1, window_bounds = array<i64: 64, 32>}, {transform_indices = @transform_2, window_bounds = array<i64: 1, 64>}]} {
    %c0 = arith.constant 0 : index
    %c0_0 = arith.constant 0 : index
    %0 = vector.load %arg1[%c0, %c0_0] : memref<1x32xf32, #tpu.memory_space<vmem>>, vector<1x32xf32>
    %c0_1 = arith.constant 0 : index
    %c0_2 = arith.constant 0 : index
    %1 = vector.load %arg2[%c0_1, %c0_2] : memref<64x32xf32, #tpu.memory_space<vmem>>, vector<64x32xf32>
    %2 = vector.broadcast %0 : vector<1x32xf32> to vector<64x32xf32>
    %3 = arith.subf %1, %2 : vector<64x32xf32>
    %4 = arith.mulf %3, %3 : vector<64x32xf32>
    %cst = arith.constant dense<0.000000e+00> : vector<64xf32>
    %5 = vector.multi_reduction <add>, %4, %cst [1] : vector<64x32xf32> to vector<64xf32>
    %6 = vector.shape_cast %5 : vector<64xf32> to vector<64x1xf32>
    %7 = math.sqrt %6 : vector<64x1xf32>
    %cst_3 = arith.constant 9.99999996E-13 : f32
    %8 = vector.broadcast %cst_3 : f32 to vector<64x1xf32>
    %9 = arith.addf %7, %8 : vector<64x1xf32>
    %cst_4 = arith.constant 1.000000e+00 : f32
    %10 = vector.broadcast %cst_4 : f32 to vector<64x1xf32>
    %11 = arith.divf %10, %9 : vector<64x1xf32>
    %12 = arith.mulf %11, %11 : vector<64x1xf32>
    %13 = tpu.transpose %12, [1, 0] : vector<64x1xf32> -> vector<1x64xf32>
    %c0_5 = arith.constant 0 : index
    %c0_6 = arith.constant 0 : index
    %14 = vector.load %arg3[%c0_5, %c0_6] : memref<1x64xf32, #tpu.memory_space<vmem>>, vector<1x64xf32>
    tpu.vector_store %arg3[%c0_5, %c0_6], %13 {strides = array<i32>} : memref<1x64xf32, #tpu.memory_space<vmem>>, vector<1x64xf32>,
    return
  }
  func.func @transform_0(%arg0: i32) -> (i32, i32) {
    %c0_i32 = arith.constant 0 : i32
    %c0_i32_0 = arith.constant 0 : i32
    %c0_i32_1 = arith.constant 0 : i32
    return %c0_i32, %c0_i32_0 : i32, i32
  }
  func.func @transform_1(%arg0: i32) -> (i32, i32) {
    %c0_i32 = arith.constant 0 : i32
    %c0_i32_0 = arith.constant 0 : i32
    return %arg0, %c0_i32 : i32, i32
  }
  func.func @transform_2(%arg0: i32) -> (i32, i32) {
    %c0_i32 = arith.constant 0 : i32
    %c0_i32_0 = arith.constant 0 : i32
    return %c0_i32, %arg0 : i32, i32
  }
}

</mosaic_0001>

<llo_original>
// kernel: tpu_custom_call.1
$region0: #{tpu_custom_call.1}
  #allocation0 [shape = 'u32[]', space=smem, size = 0x4, offset = 0x4, fixed_abs, tag = 'smem constant byte address 0x4 - core index']
  #allocation1 [shape = 'u32[144,128]{1,0:T(1,128)}', space=vmem, size = 0x12000, scoped, tag = 'internal scratch']
  %s0 = inlined_call_operand.vmem [shape: f32[1,32], index: 0, kind: input, shape index: {}]
  %s1 = inlined_call_operand.vmem [shape: f32[64,32], index: 1, kind: input, shape index: {}]
  %s2 = inlined_call_operand.hbm [shape: f32[1,64], index: 2, kind: output, shape index: {}]
  %s3 = sld [smem:[#allocation0]]
  $region18: #{tpu_custom_call.1} parent=0
    _
  %s5 = ssub.s32 1, %s3
  %s6 = scalar_select 0, %s5, %s3
  $region1: #{tpu_custom_call.1} parent=0
    #allocation2 [shape = 'u8[512]{0}', space=vmem, size = 0x400, scoped, tag = 'output window, operand 0, single buffered']
    #allocation3 [shape = 's32[1]{0}', space=sflag, size = 0x4, scoped, tag = 'scoped memory for tpu_custom_call.1']
    %7 = vsyncpa [#allocation3], 0
    // Predicated region
    $region2: #{tpu_custom_call.1} parent=1 // pred_check
      _
    $region3: #{tpu_custom_call.1} parent=1 // pred_check_branch
      %9 = sbr.rel (0) target = $region5
    $region4: #{tpu_custom_call.1} parent=1 // pred_region
      _
    $region5: #{tpu_custom_call.1} parent=1 // pred_fallthru
      _
    // Predicated region
    $region6: #{tpu_custom_call.1} parent=1 // pred_check
      _
    $region7: #{tpu_custom_call.1} parent=1 // pred_check_branch
      %11 = sbr.rel (0) target = $region9
    $region8: #{tpu_custom_call.1} parent=1 // pred_region
      _
    $region9: #{tpu_custom_call.1} parent=1 // pred_fallthru
      _
    %v12 = vld [vmem:[%s0] sm:$0x1]
    %v13 = vld [vmem:[%s1] sm:$0xff]
    %v14 = vld [vmem:[%s1 + $0x8] sm:$0xff]
    %v15 = vld [vmem:[%s1 + $0x10] sm:$0xff]
    %v16 = vld [vmem:[%s1 + $0x18] sm:$0xff]
    %v17 = vld [vmem:[%s1 + $0x20] sm:$0xff]
    %v18 = vld [vmem:[%s1 + $0x28] sm:$0xff]
    %v19 = vld [vmem:[%s1 + $0x30] sm:$0xff]
    %v20 = vld [vmem:[%s1 + $0x38] sm:$0xff]
    %v22 = vlaneseq
    %v23 = vshrl.u32 %v22, 7
    %v24 = vsub.s32 0, %v23
    %v25 = vrot.slane %v12, %v24
    %v27 = vsub.f32 %v13, %v25
    %v28 = vsub.f32 %v14, %v25
    %v29 = vsub.f32 %v15, %v25
    %v30 = vsub.f32 %v16, %v25
    %v31 = vsub.f32 %v17, %v25
    %v32 = vsub.f32 %v18, %v25
    %v33 = vsub.f32 %v19, %v25
    %v34 = vsub.f32 %v20, %v25
    %v35 = vmul.f32 %v27, %v27
    %v36 = vmul.f32 %v28, %v28
    %v37 = vmul.f32 %v29, %v29
    %v38 = vmul.f32 %v30, %v30
    %v39 = vmul.f32 %v31, %v31
    %v40 = vmul.f32 %v32, %v32
    %v41 = vmul.f32 %v33, %v33
    %v42 = vmul.f32 %v34, %v34
    %vm43 = vcmask 261120
    %v44 = vsel %vm43, %v35, 0.0
    %45 = vadd.xlane.f32.xlu0 %v44
    %v46 = vpop.xlane.xlu0 %45
    %v47 = vsel %vm43, %v36, 0.0
    %48 = vadd.xlane.f32.xlu0 %v47
    %v49 = vpop.xlane.xlu0 %48
    %v50 = vsel %vm43, %v37, 0.0
    %51 = vadd.xlane.f32.xlu0 %v50
    %v52 = vpop.xlane.xlu0 %51
    %v53 = vsel %vm43, %v38, 0.0
    %54 = vadd.xlane.f32.xlu0 %v53
    %v55 = vpop.xlane.xlu0 %54
    %v56 = vsel %vm43, %v39, 0.0
    %57 = vadd.xlane.f32.xlu0 %v56
    %v58 = vpop.xlane.xlu0 %57
    %v59 = vsel %vm43, %v40, 0.0
    %60 = vadd.xlane.f32.xlu0 %v59
    %v61 = vpop.xlane.xlu0 %60
    %v62 = vsel %vm43, %v41, 0.0
    %63 = vadd.xlane.f32.xlu0 %v62
    %v64 = vpop.xlane.xlu0 %63
    %v65 = vsel %vm43, %v42, 0.0
    %66 = vadd.xlane.f32.xlu0 %v65
    %v67 = vpop.xlane.xlu0 %66
    %v68 = vrsqrt.pop %v46
    %v69 = vmul.f32 %v46, %v68
    %vm70 = vcmp.eq.f32.partialorder %v46, inf
    %v71 = vsel %vm70, %v46, %v69
    %vm72 = vcmp.eq.f32.partialorder %v46, 0.0
    %v73 = vand.u32 %v46, 2147483648
    %v74 = vsel %vm72, %v73, %v71
    %v75 = vrsqrt.pop %v49
    %v76 = vmul.f32 %v49, %v75
    %vm77 = vcmp.eq.f32.partialorder %v49, inf
    %v78 = vsel %vm77, %v49, %v76
    %vm79 = vcmp.eq.f32.partialorder %v49, 0.0
    %v80 = vand.u32 %v49, 2147483648
    %v81 = vsel %vm79, %v80, %v78
    %v82 = vrsqrt.pop %v52
    %v83 = vmul.f32 %v52, %v82
    %vm84 = vcmp.eq.f32.partialorder %v52, inf
    %v85 = vsel %vm84, %v52, %v83
    %vm86 = vcmp.eq.f32.partialorder %v52, 0.0
    %v87 = vand.u32 %v52, 2147483648
    %v88 = vsel %vm86, %v87, %v85
    %v89 = vrsqrt.pop %v55
    %v90 = vmul.f32 %v55, %v89
    %vm91 = vcmp.eq.f32.partialorder %v55, inf
    %v92 = vsel %vm91, %v55, %v90
    %vm93 = vcmp.eq.f32.partialorder %v55, 0.0
    %v94 = vand.u32 %v55, 2147483648
    %v95 = vsel %vm93, %v94, %v92
    %v96 = vrsqrt.pop %v58
    %v97 = vmul.f32 %v58, %v96
    %vm98 = vcmp.eq.f32.partialorder %v58, inf
    %v99 = vsel %vm98, %v58, %v97
    %vm100 = vcmp.eq.f32.partialorder %v58, 0.0
    %v101 = vand.u32 %v58, 2147483648
    %v102 = vsel %vm100, %v101, %v99
    %v103 = vrsqrt.pop %v61
    %v104 = vmul.f32 %v61, %v103
    %vm105 = vcmp.eq.f32.partialorder %v61, inf
    %v106 = vsel %vm105, %v61, %v104
    %vm107 = vcmp.eq.f32.partialorder %v61, 0.0
    %v108 = vand.u32 %v61, 2147483648
    %v109 = vsel %vm107, %v108, %v106
    %v110 = vrsqrt.pop %v64
    %v111 = vmul.f32 %v64, %v110
    %vm112 = vcmp.eq.f32.partialorder %v64, inf
    %v113 = vsel %vm112, %v64, %v111
    %vm114 = vcmp.eq.f32.partialorder %v64, 0.0
    %v115 = vand.u32 %v64, 2147483648
    %v116 = vsel %vm114, %v115, %v113
    %v117 = vrsqrt.pop %v67
    %v118 = vmul.f32 %v67, %v117
    %vm119 = vcmp.eq.f32.partialorder %v67, inf
    %v120 = vsel %vm119, %v67, %v118
    %vm121 = vcmp.eq.f32.partialorder %v67, 0.0
    %v122 = vand.u32 %v67, 2147483648
    %v123 = vsel %vm121, %v122, %v120
    %v124 = vadd.f32 %v74, 1e-12
    %v125 = vadd.f32 %v81, 1e-12
    %v126 = vadd.f32 %v88, 1e-12
    %v127 = vadd.f32 %v95, 1e-12
    %v128 = vadd.f32 %v102, 1e-12
    %v129 = vadd.f32 %v109, 1e-12
    %v130 = vadd.f32 %v116, 1e-12
    %v131 = vadd.f32 %v123, 1e-12
    %v132 = vrcp.pop %v124
    %v133 = vmul.f32 1.0, %v132
    %v134 = vrcp.pop %v125
    %v135 = vmul.f32 1.0, %v134
    %v136 = vrcp.pop %v126
    %v137 = vmul.f32 1.0, %v136
    %v138 = vrcp.pop %v127
    %v139 = vmul.f32 1.0, %v138
    %v140 = vrcp.pop %v128
    %v141 = vmul.f32 1.0, %v140
    %v142 = vrcp.pop %v129
    %v143 = vmul.f32 1.0, %v142
    %v144 = vrcp.pop %v130
    %v145 = vmul.f32 1.0, %v144
    %v146 = vrcp.pop %v131
    %v147 = vmul.f32 1.0, %v146
    %v148 = vmul.f32 %v133, %v133
    %v149 = vmul.f32 %v135, %v135
    %v150 = vmul.f32 %v137, %v137
    %v151 = vmul.f32 %v139, %v139
    %v152 = vmul.f32 %v141, %v141
    %v153 = vmul.f32 %v143, %v143
    %v154 = vmul.f32 %v145, %v145
    %v155 = vmul.f32 %v147, %v147
    %156 = vxpose.xlu0.b32.start [1/16] %v148, 128
    %157 = vxpose.xlu0.b32.cont [2/16] %v149, 128
    %158 = vxpose.xlu0.b32.cont [3/16] %v150, 128
    %159 = vxpose.xlu0.b32.cont [4/16] %v151, 128
    %160 = vxpose.xlu0.b32.cont [5/16] %v152, 128
    %161 = vxpose.xlu0.b32.cont [6/16] %v153, 128
    %162 = vxpose.xlu0.b32.cont [7/16] %v154, 128
    %163 = vxpose.xlu0.b32.cont [8/16] %v155, 128
    %164 = vxpose.xlu0.b32.cont [9/16] 0.0, 128
    %165 = vxpose.xlu0.b32.cont [10/16] 0.0, 128
    %166 = vxpose.xlu0.b32.cont [11/16] 0.0, 128
    %167 = vxpose.xlu0.b32.cont [12/16] 0.0, 128
    %168 = vxpose.xlu0.b32.cont [13/16] 0.0, 128
    %169 = vxpose.xlu0.b32.cont [14/16] 0.0, 128
    %170 = vxpose.xlu0.b32.cont [15/16] 0.0, 128
    %171 = vxpose.xlu0.b32.end [16/16] 0.0, 128
    %v172 = vpop.trf.xlu0
    %v173 = vpop.trf.xlu0
    %v174 = vpop.trf.xlu0
    %v175 = vpop.trf.xlu0
    %v176 = vpop.trf.xlu0
    %v177 = vpop.trf.xlu0
    %v178 = vpop.trf.xlu0
    %v179 = vpop.trf.xlu0
    %v180 = vpop.trf.xlu0
    %v181 = vpop.trf.xlu0
    %v182 = vpop.trf.xlu0
    %v183 = vpop.trf.xlu0
    %v184 = vpop.trf.xlu0
    %v185 = vpop.trf.xlu0
    %v186 = vpop.trf.xlu0
    %v187 = vpop.trf.xlu0
    %vm188 = vcmask 516096
    %189 = vst.msk [vmem:[#allocation2] sm:$0x1] %vm188, %v172
    // Predicated region
    $region10: #{tpu_custom_call.1} parent=1 // pred_check
      _
    $region11: #{tpu_custom_call.1} parent=1 // pred_check_branch
      %191 = sbr.rel (0) target = $region13
    $region12: #{tpu_custom_call.1} parent=1 // pred_region
      %s193 = ssub.s32 16, 16
      %194 = vsyncadd [#allocation3], %s193
      %s196 = sshll.u32 [#allocation2], 4
      %s197 = int_to_ptr.vmem [resolvable:$true] %s196
      %199 = dma.vmem_to_hbm [thread:$0]  %s197, 16, %s2, [#allocation3]
    $region13: #{tpu_custom_call.1} parent=1 // pred_fallthru
      _
    // Predicated region
    $region14: #{tpu_custom_call.1} parent=1 // pred_check
      _
    $region15: #{tpu_custom_call.1} parent=1 // pred_check_branch
      %201 = sbr.rel (0) target = $region17
    $region16: #{tpu_custom_call.1} parent=1 // pred_region
      %202 = dma.done [#allocation3], 16
    $region17: #{tpu_custom_call.1} parent=1 // pred_fallthru
      _
    %203 = vsyncpa [#allocation3], 1

</llo_original>
